<compile_context>
chip_gen: v7x
topology: tpu7x:2x2x1
jax: 0.10.0
libtpu: 0.0.40
codegen_flags: <defaults>
</compile_context>

<pallas_src>
import jax
import jax.numpy as jnp
import numpy as np
from jax.experimental import pallas as pl
from jax.experimental.pallas import tpu as pltpu


def _make_fused_kernel(n_layers):
    """Kernel refs: (xT_ref, w0T, b0T, w1T, b1T, ..., oT_ref).

    Everything is transposed: batch on the lane axis, features on sublanes.
    """

    def kernel(xt_ref, *refs):
        param_refs = refs[:-1]
        o_ref = refs[-1]

        s = xt_ref[...]  # (d0, tile_m), lane-dense in the batch
        for i in range(n_layers):
            wt = param_refs[2 * i][...]      # (d_out_i, d_in_i)
            bt = param_refs[2 * i + 1][...]  # (d_out_i, 1)

            h = jnp.maximum(s, 0.0) if i > 0 else s
            # MXU matmul: S^T = W^T @ H^T + b^T   -> (d_out_i, tile_m)
            s = jnp.dot(wt, h, preferred_element_type=jnp.float32) + bt

            # Per-sample normalization over the feature (sublane) axis:
            #   (S - mean) / sqrt(std), std unbiased (ddof=1).
            # Exact sqrt + division to match the reference bit-for-bit-ish.
            d = s.shape[0]
            mean = jnp.mean(s, axis=0, keepdims=True)          # (1, tile_m)
            centered = s - mean
            var = jnp.sum(centered * centered, axis=0, keepdims=True) * (
                1.0 / (d - 1)
            )
            s = centered / jnp.sqrt(jnp.sqrt(var))

        # Final softmax over the class (sublane) axis; exact division.
        m = jnp.max(s, axis=0, keepdims=True)
        e = jnp.exp(s - m)
        denom = jnp.sum(e, axis=0, keepdims=True)
        o_ref[...] = e / denom  # (d_out, tile_m) lane-dense, unmasked store

    return kernel


def pt_deep_forward_pallas(x, weights, biases, *, tile_m=512):
    """Full PTDeep.forward (probs) as one fused Pallas call.

    x: (n, d0) f32; weights[i]: (d_{i-1}, d_i); biases[i]: (1, d_i).
    Returns probs: (n, d_out) f32.
    """
    n, d0 = x.shape
    n_layers = len(weights)
    d_out = weights[-1].shape[1]

    def round_up(a, m):
        return -(-a // m) * m

    # Lane-dense tiling: batch on the 128-lane axis, tile_m multiple of 128.
    tile_m = max(128, (tile_m // 128) * 128)
    n128 = round_up(n, 128)
    if n128 >= 2 * 128:
        # Keep >= 2 grid steps so the "parallel" axis can be split across the
        # two v7x TensorCores (and so pipelining is actually exercised).
        tile_m = min(tile_m, round_up(n128 // 2, 128))
    else:
        tile_m = 128
    n_pad = round_up(n, tile_m)

    # Transpose to the lane-dense layout (cheap wrapper-side plumbing).
    x_t = x.T  # (d0, n)
    if n_pad != n:
        # Padded columns never mix with real columns (all ops are per-sample),
        # and they are sliced off after the transpose back.
        x_t = jnp.pad(x_t, ((0, 0), (0, n_pad - n)))

    grid = (n_pad // tile_m,)

    in_specs = [pl.BlockSpec((d0, tile_m), lambda i: (0, i))]
    args = [x_t]
    for w, b in zip(weights, biases):
        w_t = w.T               # (d_out_i, d_in_i)
        b_t = b.T               # (d_out_i, 1)
        # Full-array parameter blocks: DMA'd once, VMEM-resident across steps.
        in_specs.append(pl.BlockSpec(w_t.shape, lambda i: (0, 0)))
        in_specs.append(pl.BlockSpec(b_t.shape, lambda i: (0, 0)))
        args.append(w_t)
        args.append(b_t)

    out_t = pl.pallas_call(
        _make_fused_kernel(n_layers),
        out_shape=jax.ShapeDtypeStruct((d_out, n_pad), jnp.float32),
        grid=grid,
        in_specs=in_specs,
        out_specs=pl.BlockSpec((d_out, tile_m), lambda i: (0, i)),
        compiler_params=pltpu.CompilerParams(
            dimension_semantics=("parallel",),  # megacore-shardable on v7x
        ),
    )(*args)

    probs = out_t.T
    return probs[:n] if n_pad != n else probs


def pt_deep_forward_ref(x, weights, biases):
    """Pure-JAX reference with identical semantics (row-major layout)."""

    def normalize(s):
        mean = jnp.mean(s, axis=1, keepdims=True)
        var = jnp.sum((s - mean) ** 2, axis=1, keepdims=True) / (s.shape[1] - 1)
        return (s - mean) / jnp.sqrt(jnp.sqrt(var))

    s = x @ weights[0] + biases[0]
    s = normalize(s)
    for w, b in zip(weights[1:], biases[1:]):
        h = jnp.maximum(s, 0.0)
        s = h @ w + b
        s = normalize(s)
    return jax.nn.softmax(s, axis=1)


if __name__ == "__main__":
    # layers = [16, 32, 32, 10]; activation = ReLU
    # TODO(synk): the PyTorch module takes an arbitrary `activation`; ReLU is
    # hard-wired here.
    layers = [16, 32, 32, 10]
    batch = 256  # -> n_pad=256, tile_m=128, grid=(2,): pipelining + megacore path

    key = jax.random.PRNGKey(0)
    keys = jax.random.split(key, 2 * (len(layers) - 1) + 1)

    # Deterministic parameter init mirroring torch.rand (uniform [0, 1)).
    weights = []
    biases = []
    for i in range(1, len(layers)):
        weights.append(
            jax.random.uniform(
                keys[2 * (i - 1)], (layers[i - 1], layers[i]), dtype=jnp.float32
            )
        )
        biases.append(
            jax.random.uniform(
                keys[2 * (i - 1) + 1], (1, layers[i]), dtype=jnp.float32
            )
        )

    x = jax.random.normal(keys[-1], (batch, layers[0]), dtype=jnp.float32)

    probs = pt_deep_forward_pallas(x, weights, biases)
    probs = jax.block_until_ready(probs)

    probs_ref = pt_deep_forward_ref(x, weights, biases)
    np.testing.assert_allclose(
        np.asarray(probs), np.asarray(probs_ref), rtol=2e-3, atol=1e-4
    )

    # Sanity: softmax rows sum to ~1 (exact division, no approx reciprocal).
    np.testing.assert_allclose(
        np.asarray(probs).sum(axis=1), np.ones(batch), rtol=1e-5, atol=1e-5
    )

    print("KERNEL_OK")
</pallas_src>

<mosaic_0001>
module attributes {stable_mosaic.version = 11 : i64} {
  func.func @kernel(%arg0: i32, %arg1: memref<16x128xf32, #tpu.memory_space<vmem>>, %arg2: memref<32x16xf32, #tpu.memory_space<vmem>>, %arg3: memref<32x1xf32, #tpu.memory_space<vmem>>, %arg4: memref<32x32xf32, #tpu.memory_space<vmem>>, %arg5: memref<32x1xf32, #tpu.memory_space<vmem>>, %arg6: memref<10x32xf32, #tpu.memory_space<vmem>>, %arg7: memref<10x1xf32, #tpu.memory_space<vmem>>, %arg8: memref<10x128xf32, #tpu.memory_space<vmem>>) attributes {dimension_semantics = [#tpu.dimension_semantics<parallel>], iteration_bounds = array<i64: 2>, scalar_prefetch = 0 : i64, scratch_operands = 0 : i64, tpu.core_type = #tpu.core_type<tc>, window_params = [{transform_indices = @transform_0, window_bounds = array<i64: 16, 128>}, {pipeline_mode = #tpu.pipeline_mode<synchronous>, transform_indices = @transform_1, window_bounds = array<i64: 32, 16>}, {pipeline_mode = #tpu.pipeline_mode<synchronous>, transform_indices = @transform_2, window_bounds = array<i64: 32, 1>}, {pipeline_mode = #tpu.pipeline_mode<synchronous>, transform_indices = @transform_3, window_bounds = array<i64: 32, 32>}, {pipeline_mode = #tpu.pipeline_mode<synchronous>, transform_indices = @transform_4, window_bounds = array<i64: 32, 1>}, {pipeline_mode = #tpu.pipeline_mode<synchronous>, transform_indices = @transform_5, window_bounds = array<i64: 10, 32>}, {pipeline_mode = #tpu.pipeline_mode<synchronous>, transform_indices = @transform_6, window_bounds = array<i64: 10, 1>}, {transform_indices = @transform_7, window_bounds = array<i64: 10, 128>}]} {
    %c0 = arith.constant 0 : index
    %c0_0 = arith.constant 0 : index
    %0 = vector.load %arg1[%c0, %c0_0] : memref<16x128xf32, #tpu.memory_space<vmem>>, vector<16x128xf32>
    %c0_1 = arith.constant 0 : index
    %c0_2 = arith.constant 0 : index
    %1 = vector.load %arg2[%c0_1, %c0_2] : memref<32x16xf32, #tpu.memory_space<vmem>>, vector<32x16xf32>
    %c0_3 = arith.constant 0 : index
    %c0_4 = arith.constant 0 : index
    %2 = vector.load %arg3[%c0_3, %c0_4] : memref<32x1xf32, #tpu.memory_space<vmem>>, vector<32x1xf32>
    %cst = arith.constant dense<0.000000e+00> : vector<32x128xf32>
    %3 = tpu.matmul %1, %0, %cst {dimension_numbers = #tpu.dot_dimension_numbers<[1], [0], [0], [1], [0, 0, 1, 1], [], []>} : vector<32x16xf32>, vector<16x128xf32>, vector<32x128xf32> -> vector<32x128xf32>
    %4 = vector.broadcast %2 : vector<32x1xf32> to vector<32x128xf32>
    %5 = arith.addf %3, %4 : vector<32x128xf32>
    %cst_5 = arith.constant dense<0.000000e+00> : vector<128xf32>
    %6 = vector.multi_reduction <add>, %5, %cst_5 [0] : vector<32x128xf32> to vector<128xf32>
    %7 = vector.shape_cast %6 : vector<128xf32> to vector<1x128xf32>
    %cst_6 = arith.constant 3.200000e+01 : f32
    %8 = vector.broadcast %cst_6 : f32 to vector<1x128xf32>
    %9 = arith.divf %7, %8 : vector<1x128xf32>
    %10 = vector.broadcast %9 : vector<1x128xf32> to vector<32x128xf32>
    %11 = arith.subf %5, %10 : vector<32x128xf32>
    %12 = arith.mulf %11, %11 : vector<32x128xf32>
    %cst_7 = arith.constant dense<0.000000e+00> : vector<128xf32>
    %13 = vector.multi_reduction <add>, %12, %cst_7 [0] : vector<32x128xf32> to vector<128xf32>
    %14 = vector.shape_cast %13 : vector<128xf32> to vector<1x128xf32>
    %cst_8 = arith.constant 0.0322580636 : f32
    %15 = vector.broadcast %cst_8 : f32 to vector<1x128xf32>
    %16 = arith.mulf %14, %15 : vector<1x128xf32>
    %17 = math.sqrt %16 : vector<1x128xf32>
    %18 = math.sqrt %17 : vector<1x128xf32>
    %19 = vector.broadcast %18 : vector<1x128xf32> to vector<32x128xf32>
    %20 = arith.divf %11, %19 : vector<32x128xf32>
    %c0_9 = arith.constant 0 : index
    %c0_10 = arith.constant 0 : index
    %21 = vector.load %arg4[%c0_9, %c0_10] : memref<32x32xf32, #tpu.memory_space<vmem>>, vector<32x32xf32>
    %c0_11 = arith.constant 0 : index
    %c0_12 = arith.constant 0 : index
    %22 = vector.load %arg5[%c0_11, %c0_12] : memref<32x1xf32, #tpu.memory_space<vmem>>, vector<32x1xf32>
    %cst_13 = arith.constant 0.000000e+00 : f32
    %23 = vector.broadcast %cst_13 : f32 to vector<32x128xf32>
    %24 = arith.maximumf %20, %23 : vector<32x128xf32>
    %cst_14 = arith.constant dense<0.000000e+00> : vector<32x128xf32>
    %25 = tpu.matmul %21, %24, %cst_14 {dimension_numbers = #tpu.dot_dimension_numbers<[1], [0], [0], [1], [0, 0, 1, 1], [], []>} : vector<32x32xf32>, vector<32x128xf32>, vector<32x128xf32> -> vector<32x128xf32>
    %26 = vector.broadcast %22 : vector<32x1xf32> to vector<32x128xf32>
    %27 = arith.addf %25, %26 : vector<32x128xf32>
    %cst_15 = arith.constant dense<0.000000e+00> : vector<128xf32>
    %28 = vector.multi_reduction <add>, %27, %cst_15 [0] : vector<32x128xf32> to vector<128xf32>
    %29 = vector.shape_cast %28 : vector<128xf32> to vector<1x128xf32>
    %cst_16 = arith.constant 3.200000e+01 : f32
    %30 = vector.broadcast %cst_16 : f32 to vector<1x128xf32>
    %31 = arith.divf %29, %30 : vector<1x128xf32>
    %32 = vector.broadcast %31 : vector<1x128xf32> to vector<32x128xf32>
    %33 = arith.subf %27, %32 : vector<32x128xf32>
    %34 = arith.mulf %33, %33 : vector<32x128xf32>
    %cst_17 = arith.constant dense<0.000000e+00> : vector<128xf32>
    %35 = vector.multi_reduction <add>, %34, %cst_17 [0] : vector<32x128xf32> to vector<128xf32>
    %36 = vector.shape_cast %35 : vector<128xf32> to vector<1x128xf32>
    %cst_18 = arith.constant 0.0322580636 : f32
    %37 = vector.broadcast %cst_18 : f32 to vector<1x128xf32>
    %38 = arith.mulf %36, %37 : vector<1x128xf32>
    %39 = math.sqrt %38 : vector<1x128xf32>
    %40 = math.sqrt %39 : vector<1x128xf32>
    %41 = vector.broadcast %40 : vector<1x128xf32> to vector<32x128xf32>
    %42 = arith.divf %33, %41 : vector<32x128xf32>
    %c0_19 = arith.constant 0 : index
    %c0_20 = arith.constant 0 : index
    %43 = vector.load %arg6[%c0_19, %c0_20] : memref<10x32xf32, #tpu.memory_space<vmem>>, vector<10x32xf32>
    %c0_21 = arith.constant 0 : index
    %c0_22 = arith.constant 0 : index
    %44 = vector.load %arg7[%c0_21, %c0_22] : memref<10x1xf32, #tpu.memory_space<vmem>>, vector<10x1xf32>
    %cst_23 = arith.constant 0.000000e+00 : f32
    %45 = vector.broadcast %cst_23 : f32 to vector<32x128xf32>
    %46 = arith.maximumf %42, %45 : vector<32x128xf32>
    %cst_24 = arith.constant dense<0.000000e+00> : vector<10x128xf32>
    %47 = tpu.matmul %43, %46, %cst_24 {dimension_numbers = #tpu.dot_dimension_numbers<[1], [0], [0], [1], [0, 0, 1, 1], [], []>} : vector<10x32xf32>, vector<32x128xf32>, vector<10x128xf32> -> vector<10x128xf32>
    %48 = vector.broadcast %44 : vector<10x1xf32> to vector<10x128xf32>
    %49 = arith.addf %47, %48 : vector<10x128xf32>
    %cst_25 = arith.constant dense<0.000000e+00> : vector<128xf32>
    %50 = vector.multi_reduction <add>, %49, %cst_25 [0] : vector<10x128xf32> to vector<128xf32>
    %51 = vector.shape_cast %50 : vector<128xf32> to vector<1x128xf32>
    %cst_26 = arith.constant 1.000000e+01 : f32
    %52 = vector.broadcast %cst_26 : f32 to vector<1x128xf32>
    %53 = arith.divf %51, %52 : vector<1x128xf32>
    %54 = vector.broadcast %53 : vector<1x128xf32> to vector<10x128xf32>
    %55 = arith.subf %49, %54 : vector<10x128xf32>
    %56 = arith.mulf %55, %55 : vector<10x128xf32>
    %cst_27 = arith.constant dense<0.000000e+00> : vector<128xf32>
    %57 = vector.multi_reduction <add>, %56, %cst_27 [0] : vector<10x128xf32> to vector<128xf32>
    %58 = vector.shape_cast %57 : vector<128xf32> to vector<1x128xf32>
    %cst_28 = arith.constant 0.111111112 : f32
    %59 = vector.broadcast %cst_28 : f32 to vector<1x128xf32>
    %60 = arith.mulf %58, %59 : vector<1x128xf32>
    %61 = math.sqrt %60 : vector<1x128xf32>
    %62 = math.sqrt %61 : vector<1x128xf32>
    %63 = vector.broadcast %62 : vector<1x128xf32> to vector<10x128xf32>
    %64 = arith.divf %55, %63 : vector<10x128xf32>
    %cst_29 = arith.constant dense<0xFF800000> : vector<128xf32>
    %65 = vector.multi_reduction <maximumf>, %64, %cst_29 [0] : vector<10x128xf32> to vector<128xf32>
    %66 = vector.shape_cast %65 : vector<128xf32> to vector<1x128xf32>
    %67 = vector.broadcast %66 : vector<1x128xf32> to vector<10x128xf32>
    %68 = arith.subf %64, %67 : vector<10x128xf32>
    %69 = math.exp %68 : vector<10x128xf32>
    %cst_30 = arith.constant dense<0.000000e+00> : vector<128xf32>
    %70 = vector.multi_reduction <add>, %69, %cst_30 [0] : vector<10x128xf32> to vector<128xf32>
    %71 = vector.shape_cast %70 : vector<128xf32> to vector<1x128xf32>
    %72 = vector.broadcast %71 : vector<1x128xf32> to vector<10x128xf32>
    %73 = arith.divf %69, %72 : vector<10x128xf32>
    %c0_31 = arith.constant 0 : index
    %c0_32 = arith.constant 0 : index
    %74 = vector.load %arg8[%c0_31, %c0_32] : memref<10x128xf32, #tpu.memory_space<vmem>>, vector<10x128xf32>
    tpu.vector_store %arg8[%c0_31, %c0_32], %73 {strides = array<i32>} : memref<10x128xf32, #tpu.memory_space<vmem>>, vector<10x128xf32>,
    return
  }
  func.func @transform_0(%arg0: i32) -> (i32, i32) {
    %c0_i32 = arith.constant 0 : i32
    %c0_i32_0 = arith.constant 0 : i32
    return %c0_i32, %arg0 : i32, i32
  }
  func.func @transform_1(%arg0: i32) -> (i32, i32) {
    %c0_i32 = arith.constant 0 : i32
    %c0_i32_0 = arith.constant 0 : i32
    %c0_i32_1 = arith.constant 0 : i32
    return %c0_i32, %c0_i32_0 : i32, i32
  }
  func.func @transform_2(%arg0: i32) -> (i32, i32) {
    %c0_i32 = arith.constant 0 : i32
    %c0_i32_0 = arith.constant 0 : i32
    %c0_i32_1 = arith.constant 0 : i32
    return %c0_i32, %c0_i32_0 : i32, i32
  }
  func.func @transform_3(%arg0: i32) -> (i32, i32) {
    %c0_i32 = arith.constant 0 : i32
    %c0_i32_0 = arith.constant 0 : i32
    %c0_i32_1 = arith.constant 0 : i32
    return %c0_i32, %c0_i32_0 : i32, i32
  }
  func.func @transform_4(%arg0: i32) -> (i32, i32) {
    %c0_i32 = arith.constant 0 : i32
    %c0_i32_0 = arith.constant 0 : i32
    %c0_i32_1 = arith.constant 0 : i32
    return %c0_i32, %c0_i32_0 : i32, i32
  }
  func.func @transform_5(%arg0: i32) -> (i32, i32) {
    %c0_i32 = arith.constant 0 : i32
    %c0_i32_0 = arith.constant 0 : i32
    %c0_i32_1 = arith.constant 0 : i32
    return %c0_i32, %c0_i32_0 : i32, i32
  }
  func.func @transform_6(%arg0: i32) -> (i32, i32) {
    %c0_i32 = arith.constant 0 : i32
    %c0_i32_0 = arith.constant 0 : i32
    %c0_i32_1 = arith.constant 0 : i32
    return %c0_i32, %c0_i32_0 : i32, i32
  }
  func.func @transform_7(%arg0: i32) -> (i32, i32) {
    %c0_i32 = arith.constant 0 : i32
    %c0_i32_0 = arith.constant 0 : i32
    return %c0_i32, %arg0 : i32, i32
  }
}

</mosaic_0001>

<llo_original>
// kernel: tpu_custom_call.1
$region0: #{tpu_custom_call.1}
  #allocation0 [shape = 'u32[]', space=smem, size = 0x4, offset = 0x4, fixed_abs, tag = 'smem constant byte address 0x4 - core index']
  #allocation1 [shape = 'u32[144,128]{1,0:T(1,128)}', space=vmem, size = 0x12000, scoped, tag = 'internal scratch']
  %s0 = inlined_call_operand.vmem [shape: f32[16,256], index: 0, kind: input, shape index: {}]
  %s1 = inlined_call_operand.vmem [shape: f32[32,16], index: 1, kind: input, shape index: {}]
  %s2 = inlined_call_operand.vmem [shape: f32[32,1], index: 2, kind: input, shape index: {}]
  %s3 = inlined_call_operand.vmem [shape: f32[32,32], index: 3, kind: input, shape index: {}]
  %s4 = inlined_call_operand.vmem [shape: f32[32,1], index: 4, kind: input, shape index: {}]
  %s5 = inlined_call_operand.vmem [shape: f32[10,32], index: 5, kind: input, shape index: {}]
  %s6 = inlined_call_operand.vmem [shape: f32[10,1], index: 6, kind: input, shape index: {}]
  %s7 = inlined_call_operand.hbm [shape: f32[10,256], index: 7, kind: output, shape index: {}]
  %s8 = sld [smem:[#allocation0]]
  $region99: #{tpu_custom_call.1} parent=0
    _
  %s10 = ssub.s32 1, %s8
  %s11 = scalar_select 0, %s10, %s8
  $region1: #{tpu_custom_call.1} parent=0
    #allocation2 [shape = 'u8[16384]{0}', space=vmem, size = 0x4000, scoped, tag = 'input window, operand 0']
    #allocation3 [shape = 'u8[16384]{0}', space=vmem, size = 0x4000, scoped, tag = 'output window, operand 0']
    #allocation4 [shape = 's32[2]{0}', space=sflag, size = 0x8, scoped, tag = 'scoped memory for tpu_custom_call.1']
    %12 = vsyncpa [#allocation4], 0
    %s13 = scalar_lea.sflag [#allocation4], 1
    %14 = vsyncpa %s13, 0
    loop: start=0, step=1, limit=4
    $region2: #{tpu_custom_call.1} parent=1 // loop_pre_header
      _
    $region3: #{tpu_custom_call.1} parent=1 // loop_header
      %s16 = sphi 0, %s20
      %p17 = scmp.ge.s32.totalorder %s16, 4
      %s26 = sphi 0, %s28
      %s29 = sphi 0, %s26
      %s30 = sphi 0, %s29
      %s46 = sphi 0, %s30
      %s50 = sphi 0, %s50
      %s52 = sphi 0, %s50
      %s53 = sphi 0, %s52
      %s67 = sphi 0, %s53
      %s71 = sphi 0, %s71
      %s73 = sphi 0, %s71
      %s74 = sphi 0, %s73
      %s88 = sphi 0, %s74
      %s92 = sphi 0, %s92
      %s94 = sphi 0, %s92
      %s95 = sphi 0, %s94
      %s109 = sphi 0, %s95
      %s113 = sphi 0, %s113
      %s115 = sphi 0, %s113
      %s116 = sphi 0, %s115
      %s130 = sphi 0, %s116
      %s134 = sphi 0, %s134
      %s136 = sphi 0, %s134
      %s137 = sphi 0, %s136
      %s151 = sphi 0, %s137
      %s155 = sphi 0, %s155
      %s157 = sphi 0, %s155
      %s158 = sphi 0, %s157
      %s172 = sphi 0, %s158
      %s178 = sphi 0, %s180
      %s181 = sphi 0, %s178
      %s182 = sphi 0, %s181
      %s198 = sphi 0, %s182
    $region4: #{tpu_custom_call.1} parent=1 // loop_header_branch
      %19 = sbr.rel (%p17) target = $region8
    $region5: #{tpu_custom_call.1} parent=1 // loop_body
      %s21 = ssub.s32 %s16, 1
      %s22 = ssub.s32 %s16, 2
      %s23 = sadd.s32 %s16, 1
      %s24 = ssub.s32 %s16, %s23
      %p25 = scmp.eq.s32.totalorder %s24, 0
      %s27 = sadd.s32 %s26, 1
      %s28 = scalar_select %p25, %s26, %s27
      %p31 = pneg %p25
      %p32 = scmp.eq.s32.totalorder %s16, 1
      %p33 = por %p31, %p32
      %p34 = scmp.ne.s32.totalorder %s26, %s29
      %p35 = scmp.eq.s32.totalorder %s16, 0
      %p36 = por %p34, %p35
      %p37 = scmp.ne.s32.totalorder %s26, %s29
      %p38 = scmp.eq.s32.totalorder %s21, 1
      %p39 = por %p37, %p38
      %p40 = scmp.ne.s32.totalorder %s29, %s30
      %p41 = scmp.eq.s32.totalorder %s21, 0
      %p42 = por %p40, %p41
      %p43 = scmp.ne.s32.totalorder %s29, %s30
      %p44 = scmp.eq.s32.totalorder %s22, 1
      %p45 = por %p43, %p44
      %p47 = scmp.ne.s32.totalorder %s30, %s46
      %p48 = scmp.eq.s32.totalorder %s22, 0
      %p49 = por %p47, %p48
      %s51 = sadd.s32 %s50, 1
      %p54 = scmp.eq.s32.totalorder %s16, 1
      %p55 = scmp.ne.s32.totalorder %s50, %s52
      %p56 = scmp.eq.s32.totalorder %s16, 0
      %p57 = por %p55, %p56
      %p58 = scmp.ne.s32.totalorder %s50, %s52
      %p59 = scmp.eq.s32.totalorder %s21, 1
      %p60 = por %p58, %p59
      %p61 = scmp.ne.s32.totalorder %s52, %s53
      %p62 = scmp.eq.s32.totalorder %s21, 0
      %p63 = por %p61, %p62
      %p64 = scmp.ne.s32.totalorder %s52, %s53
      %p65 = scmp.eq.s32.totalorder %s22, 1
      %p66 = por %p64, %p65
      %p68 = scmp.ne.s32.totalorder %s53, %s67
      %p69 = scmp.eq.s32.totalorder %s22, 0
      %p70 = por %p68, %p69
      %s72 = sadd.s32 %s71, 1
      %p75 = scmp.eq.s32.totalorder %s16, 1
      %p76 = scmp.ne.s32.totalorder %s71, %s73
      %p77 = scmp.eq.s32.totalorder %s16, 0
      %p78 = por %p76, %p77
      %p79 = scmp.ne.s32.totalorder %s71, %s73
      %p80 = scmp.eq.s32.totalorder %s21, 1
      %p81 = por %p79, %p80
      %p82 = scmp.ne.s32.totalorder %s73, %s74
      %p83 = scmp.eq.s32.totalorder %s21, 0
      %p84 = por %p82, %p83
      %p85 = scmp.ne.s32.totalorder %s73, %s74
      %p86 = scmp.eq.s32.totalorder %s22, 1
      %p87 = por %p85, %p86
      %p89 = scmp.ne.s32.totalorder %s74, %s88
      %p90 = scmp.eq.s32.totalorder %s22, 0
      %p91 = por %p89, %p90
      %s93 = sadd.s32 %s92, 1
      %p96 = scmp.eq.s32.totalorder %s16, 1
      %p97 = scmp.ne.s32.totalorder %s92, %s94
      %p98 = scmp.eq.s32.totalorder %s16, 0
      %p99 = por %p97, %p98
      %p100 = scmp.ne.s32.totalorder %s92, %s94
      %p101 = scmp.eq.s32.totalorder %s21, 1
      %p102 = por %p100, %p101
      %p103 = scmp.ne.s32.totalorder %s94, %s95
      %p104 = scmp.eq.s32.totalorder %s21, 0
      %p105 = por %p103, %p104
      %p106 = scmp.ne.s32.totalorder %s94, %s95
      %p107 = scmp.eq.s32.totalorder %s22, 1
      %p108 = por %p106, %p107
      %p110 = scmp.ne.s32.totalorder %s95, %s109
      %p111 = scmp.eq.s32.totalorder %s22, 0
      %p112 = por %p110, %p111
      %s114 = sadd.s32 %s113, 1
      %p117 = scmp.eq.s32.totalorder %s16, 1
      %p118 = scmp.ne.s32.totalorder %s113, %s115
      %p119 = scmp.eq.s32.totalorder %s16, 0
      %p120 = por %p118, %p119
      %p121 = scmp.ne.s32.totalorder %s113, %s115
      %p122 = scmp.eq.s32.totalorder %s21, 1
      %p123 = por %p121, %p122
      %p124 = scmp.ne.s32.totalorder %s115, %s116
      %p125 = scmp.eq.s32.totalorder %s21, 0
      %p126 = por %p124, %p125
      %p127 = scmp.ne.s32.totalorder %s115, %s116
      %p128 = scmp.eq.s32.totalorder %s22, 1
      %p129 = por %p127, %p128
      %p131 = scmp.ne.s32.totalorder %s116, %s130
      %p132 = scmp.eq.s32.totalorder %s22, 0
      %p133 = por %p131, %p132
      %s135 = sadd.s32 %s134, 1
      %p138 = scmp.eq.s32.totalorder %s16, 1
      %p139 = scmp.ne.s32.totalorder %s134, %s136
      %p140 = scmp.eq.s32.totalorder %s16, 0
      %p141 = por %p139, %p140
      %p142 = scmp.ne.s32.totalorder %s134, %s136
      %p143 = scmp.eq.s32.totalorder %s21, 1
      %p144 = por %p142, %p143
      %p145 = scmp.ne.s32.totalorder %s136, %s137
      %p146 = scmp.eq.s32.totalorder %s21, 0
      %p147 = por %p145, %p146
      %p148 = scmp.ne.s32.totalorder %s136, %s137
      %p149 = scmp.eq.s32.totalorder %s22, 1
      %p150 = por %p148, %p149
      %p152 = scmp.ne.s32.totalorder %s137, %s151
      %p153 = scmp.eq.s32.totalorder %s22, 0
      %p154 = por %p152, %p153
      %s156 = sadd.s32 %s155, 1
      %p159 = scmp.eq.s32.totalorder %s16, 1
      %p160 = scmp.ne.s32.totalorder %s155, %s157
      %p161 = scmp.eq.s32.totalorder %s16, 0
      %p162 = por %p160, %p161
      %p163 = scmp.ne.s32.totalorder %s155, %s157
      %p164 = scmp.eq.s32.totalorder %s21, 1
      %p165 = por %p163, %p164
      %p166 = scmp.ne.s32.totalorder %s157, %s158
      %p167 = scmp.eq.s32.totalorder %s21, 0
      %p168 = por %p166, %p167
      %p169 = scmp.ne.s32.totalorder %s157, %s158
      %p170 = scmp.eq.s32.totalorder %s22, 1
      %p171 = por %p169, %p170
      %p173 = scmp.ne.s32.totalorder %s158, %s172
      %p174 = scmp.eq.s32.totalorder %s22, 0
      %p175 = por %p173, %p174
      %s176 = ssub.s32 %s16, %s23
      %p177 = scmp.eq.s32.totalorder %s176, 0
      %s179 = sadd.s32 %s178, 1
      %s180 = scalar_select %p177, %s178, %s179
      %p183 = pneg %p177
      %p184 = scmp.eq.s32.totalorder %s16, 1
      %p185 = por %p183, %p184
      %p186 = scmp.ne.s32.totalorder %s178, %s181
      %p187 = scmp.eq.s32.totalorder %s16, 0
      %p188 = por %p186, %p187
      %p189 = scmp.ne.s32.totalorder %s178, %s181
      %p190 = scmp.eq.s32.totalorder %s21, 1
      %p191 = por %p189, %p190
      %p192 = scmp.ne.s32.totalorder %s181, %s182
      %p193 = scmp.eq.s32.totalorder %s21, 0
      %p194 = por %p192, %p193
      %p195 = scmp.ne.s32.totalorder %s181, %s182
      %p196 = scmp.eq.s32.totalorder %s22, 1
      %p197 = por %p195, %p196
      %p199 = scmp.ne.s32.totalorder %s182, %s198
      %p200 = scmp.eq.s32.totalorder %s22, 0
      %p201 = por %p199, %p200
      %p202 = scmp.le.s32.totalorder 1, %s16
      %p203 = scmp.lt.s32.totalorder %s16, 3
      %p204 = pnand %p202, %p203
      %p205 = pneg %p204
      // Predicated region
      $region9: #{tpu_custom_call.1} parent=5 // pred_check
        _
      $region10: #{tpu_custom_call.1} parent=5 // pred_check_branch
        %207 = sbr.rel (%p204) target = $region12
      $region11: #{tpu_custom_call.1} parent=5 // pred_region
        %s208 = ssub.s32 %s16, 1
        // Predicated region
        $region13: #{tpu_custom_call.1} parent=11 // pred_check
          %p209 = pneg %p63
        $region14: #{tpu_custom_call.1} parent=11 // pred_check_branch
          %211 = sbr.rel (%p209) target = $region16
        $region15: #{tpu_custom_call.1} parent=11 // pred_region
          _
        $region16: #{tpu_custom_call.1} parent=11 // pred_fallthru
          _
        // Predicated region
        $region17: #{tpu_custom_call.1} parent=11 // pred_check
          %p212 = pneg %p84
        $region18: #{tpu_custom_call.1} parent=11 // pred_check_branch
          %214 = sbr.rel (%p212) target = $region20
        $region19: #{tpu_custom_call.1} parent=11 // pred_region
          _
        $region20: #{tpu_custom_call.1} parent=11 // pred_fallthru
          _
        // Predicated region
        $region21: #{tpu_custom_call.1} parent=11 // pred_check
          %p215 = pneg %p105
        $region22: #{tpu_custom_call.1} parent=11 // pred_check_branch
          %217 = sbr.rel (%p215) target = $region24
        $region23: #{tpu_custom_call.1} parent=11 // pred_region
          _
        $region24: #{tpu_custom_call.1} parent=11 // pred_fallthru
          _
        // Predicated region
        $region25: #{tpu_custom_call.1} parent=11 // pred_check
          %p218 = pneg %p126
        $region26: #{tpu_custom_call.1} parent=11 // pred_check_branch
          %220 = sbr.rel (%p218) target = $region28
        $region27: #{tpu_custom_call.1} parent=11 // pred_region
          _
        $region28: #{tpu_custom_call.1} parent=11 // pred_fallthru
          _
        // Predicated region
        $region29: #{tpu_custom_call.1} parent=11 // pred_check
          %p221 = pneg %p147
        $region30: #{tpu_custom_call.1} parent=11 // pred_check_branch
          %223 = sbr.rel (%p221) target = $region32
        $region31: #{tpu_custom_call.1} parent=11 // pred_region
          _
        $region32: #{tpu_custom_call.1} parent=11 // pred_fallthru
          _
        // Predicated region
        $region33: #{tpu_custom_call.1} parent=11 // pred_check
          %p224 = pneg %p168
        $region34: #{tpu_custom_call.1} parent=11 // pred_check_branch
          %226 = sbr.rel (%p224) target = $region36
        $region35: #{tpu_custom_call.1} parent=11 // pred_region
          _
        $region36: #{tpu_custom_call.1} parent=11 // pred_fallthru
          _
      $region12: #{tpu_custom_call.1} parent=5 // pred_fallthru
        _
      %p227 = scmp.lt.s32.totalorder %s16, 2
      // Predicated region
      $region37: #{tpu_custom_call.1} parent=5 // pred_check
        %p228 = pneg %p227
      $region38: #{tpu_custom_call.1} parent=5 // pred_check_branch
        %230 = sbr.rel (%p228) target = $region40
      $region39: #{tpu_custom_call.1} parent=5 // pred_region
        // Predicated region
        $region41: #{tpu_custom_call.1} parent=39 // pred_check
          %p231 = pneg %p36
        $region42: #{tpu_custom_call.1} parent=39 // pred_check_branch
          %233 = sbr.rel (%p231) target = $region44
        $region43: #{tpu_custom_call.1} parent=39 // pred_region
          %s234 = sand.u32 %s26, 1
          %s235 = sand.u32 %s26, 1
          %s236 = smul.addr %s235, 16
          %s237 = scalar_lea.vmem [#allocation2], %s236
          %s238 = smul.addr %s16, 8
          %s239 = scalar_lea.vmem %s0, %s238
          // Predicated region
          $region45: #{tpu_custom_call.1} parent=43 // pred_check
            _
          $region46: #{tpu_custom_call.1} parent=43 // pred_check_branch
            %241 = sbr.rel (0) target = $region48
          $region47: #{tpu_custom_call.1} parent=43 // pred_region
            // Predicated region
            $region49: #{tpu_custom_call.1} parent=47 // pred_check
              _
            $region50: #{tpu_custom_call.1} parent=47 // pred_check_branch
              %243 = sbr.rel (0) target = $region52
            $region51: #{tpu_custom_call.1} parent=47 // pred_region
              // Predicated region
              $region64: #{tpu_custom_call.1} parent=51 // pred_check
                _
              $region65: #{tpu_custom_call.1} parent=51 // pred_check_branch
                %260 = sbr.rel (0) target = $region67
              $region66: #{tpu_custom_call.1} parent=51 // pred_region
                loop: start=0, step=1, limit=1
                $region68: #{tpu_custom_call.1} parent=66 // loop_pre_header
                  _
                $region69: #{tpu_custom_call.1} parent=66 // loop_header
                  %s262 = sphi 0, %s266
                  %p263 = scmp.ge.s32.totalorder %s262, 1
                  %s267 = sphi %s239, %s239
                  %s268 = sphi %s237, %s237
                $region70: #{tpu_custom_call.1} parent=66 // loop_header_branch
                  %265 = sbr.rel (%p263) target = $region74
                $region71: #{tpu_custom_call.1} parent=66 // loop_body
                  %v269 = vld [vmem:[%s267] sm:$0xff]
                  %270 = vst [vmem:[%s268] sm:$0xff] %v269
                  %v271 = vld [vmem:[%s267 + $0x10] sm:$0xff]
                  %272 = vst [vmem:[%s268 + $0x8] sm:$0xff] %v271
                $region72: #{tpu_custom_call.1} parent=66 // loop_footer
                  %s266 = sadd.s32 1, %s262
                $region73: #{tpu_custom_call.1} parent=66 // loop_footer_branch
                  %261 = sbr.rel target = $region69
                $region74: #{tpu_custom_call.1} parent=66 // loop_exit
                  _
              $region67: #{tpu_custom_call.1} parent=51 // pred_fallthru
                _
              // Predicated region
              $region75: #{tpu_custom_call.1} parent=51 // pred_check
                _
              $region76: #{tpu_custom_call.1} parent=51 // pred_check_branch
                %274 = sbr.rel target = $region78
              $region77: #{tpu_custom_call.1} parent=51 // pred_region
                _
              $region78: #{tpu_custom_call.1} parent=51 // pred_fallthru
                _
            $region52: #{tpu_custom_call.1} parent=47 // pred_fallthru
              _
            // Predicated region
            $region53: #{tpu_custom_call.1} parent=47 // pred_check
              _
            $region54: #{tpu_custom_call.1} parent=47 // pred_check_branch
              %245 = sbr.rel target = $region56
            $region55: #{tpu_custom_call.1} parent=47 // pred_region
              loop: start=0, step=1, limit=1
              $region57: #{tpu_custom_call.1} parent=55 // loop_pre_header
                _
              $region58: #{tpu_custom_call.1} parent=55 // loop_header
                %s248 = sphi 0, %s252
                %p249 = scmp.ge.s32.totalorder %s248, 1
                %s253 = sphi %s239, %s239
                %s254 = sphi %s237, %s237
              $region59: #{tpu_custom_call.1} parent=55 // loop_header_branch
                %251 = sbr.rel (%p249) target = $region63
              $region60: #{tpu_custom_call.1} parent=55 // loop_body
                %v255 = vld [vmem:[%s253] sm:$0xff]
                %256 = vst [vmem:[%s254] sm:$0xff] %v255
                %v257 = vld [vmem:[%s253 + $0x10] sm:$0xff]
                %258 = vst [vmem:[%s254 + $0x8] sm:$0xff] %v257
              $region61: #{tpu_custom_call.1} parent=55 // loop_footer
                %s252 = sadd.s32 1, %s248
              $region62: #{tpu_custom_call.1} parent=55 // loop_footer_branch
                %247 = sbr.rel target = $region58
              $region63: #{tpu_custom_call.1} parent=55 // loop_exit
                _
            $region56: #{tpu_custom_call.1} parent=47 // pred_fallthru
              _
          $region48: #{tpu_custom_call.1} parent=43 // pred_fallthru
            _
          %275 = vnop
        $region44: #{tpu_custom_call.1} parent=39 // pred_fallthru
          _
      $region40: #{tpu_custom_call.1} parent=5 // pred_fallthru
        _
      %p276 = scmp.le.s32.totalorder 1, %s16
      %p277 = scmp.lt.s32.totalorder %s16, 3
      %p278 = pnand %p276, %p277
      %p279 = pneg %p278
      // Predicated region
      $region79: #{tpu_custom_call.1} parent=5 // pred_check
        _
      $region80: #{tpu_custom_call.1} parent=5 // pred_check_branch
        %281 = sbr.rel (%p278) target = $region82
      $region81: #{tpu_custom_call.1} parent=5 // pred_region
        %s282 = ssub.s32 %s16, 1
        %s283 = sand.u32 %s29, 1
        %s284 = sand.u32 %s29, 1
        %s285 = smul.addr %s284, 16
        %s286 = scalar_lea.vmem [#allocation2], %s285
        // Predicated region
        $region83: #{tpu_custom_call.1} parent=81 // pred_check
          %p287 = pneg %p42
        $region84: #{tpu_custom_call.1} parent=81 // pred_check_branch
          %289 = sbr.rel (%p287) target = $region86
        $region85: #{tpu_custom_call.1} parent=81 // pred_region
          _
        $region86: #{tpu_custom_call.1} parent=81 // pred_fallthru
          _
        %s290 = sand.u32 %s29, 1
        %s291 = sand.u32 %s29, 1
        %s292 = smul.addr %s291, 16
        %s293 = scalar_lea.vmem [#allocation2], %s292
        %p294 = pneg %p42
        %p295 = pneg %p39
        %p296 = pneg %p63
        %p297 = pneg %p60
        %p298 = pneg %p84
        %p299 = pneg %p81
        %p300 = pneg %p105
        %p301 = pneg %p102
        %p302 = pneg %p126
        %p303 = pneg %p123
        %p304 = pneg %p147
        %p305 = pneg %p144
        %p306 = pneg %p168
        %p307 = pneg %p165
        %p308 = pneg %p194
        %p309 = pneg %p191
        %s310 = sand.u32 %s181, 1
        %s311 = scalar_lea.sflag [#allocation4], %s310
        %s312 = sand.u32 %s181, 1
        %s313 = smul.addr %s312, 16
        %s314 = scalar_lea.vmem [#allocation3], %s313
        %v315 = vld [vmem:[%s286] sm:$0xff]
        %v316 = vld [vmem:[%s286 + $0x8] sm:$0xff]
        %v317 = vld [vmem:[%s1] sm:$0xff]
        %v318 = vld [vmem:[%s1 + $0x8] sm:$0xff]
        %v319 = vld [vmem:[%s1 + $0x10] sm:$0xff]
        %v320 = vld [vmem:[%s1 + $0x18] sm:$0xff]
        %v321 = vld [vmem:[%s2] sm:$0xff]
        %v322 = vld [vmem:[%s2 + $0x8] sm:$0xff]
        %v323 = vld [vmem:[%s2 + $0x10] sm:$0xff]
        %v324 = vld [vmem:[%s2 + $0x18] sm:$0xff]
        %326 = vset.pattern.permute.xlu0 0
        %327 = vperm.xlu0 %326, %v321
        %v328 = vpop.permute.xlu0 %327
        %331 = vset.pattern.permute.xlu0 0
        %332 = vperm.xlu0 %331, %v322
        %v333 = vpop.permute.xlu0 %332
        %336 = vset.pattern.permute.xlu0 0
        %337 = vperm.xlu0 %336, %v323
        %v338 = vpop.permute.xlu0 %337
        %341 = vset.pattern.permute.xlu0 0
        %342 = vperm.xlu0 %341, %v324
        %v343 = vpop.permute.xlu0 %342
        %vm345 = vcmask 130048
        %v347 = vsel %vm345, %v317, 0
        %v350 = vsel %vm345, %v318, 0
        %v353 = vsel %vm345, %v319, 0
        %v356 = vsel %vm345, %v320, 0
        %358 = vmatprep.subr.mxu0 0.0
        %359 = vmatpush1.msra.mxu0 %v315
        %360 = vmatprep.subr.mxu0 0.0
        %361 = vmatpush1.msra.mxu0 %v316
        %362 = vmatprep.subr.mxu0 0.0
        %363 = vmatpush1.msra.mxu0 0.0
        %364 = vmatprep.subr.mxu0 0.0
        %365 = vmatpush1.msra.mxu0 0.0
        %366 = vmatprep.subr.mxu0 0.0
        %367 = vmatpush1.msra.mxu0 0.0
        %368 = vmatprep.subr.mxu0 0.0
        %369 = vmatpush1.msra.mxu0 0.0
        %370 = vmatprep.subr.mxu0 0.0
        %371 = vmatpush1.msra.mxu0 0.0
        %372 = vmatprep.subr.mxu0 0.0
        %373 = vmatpush1.msra.mxu0 0.0
        %374 = vmatprep.subr.mxu0 0.0
        %375 = vmatpush1.msra.mxu0 0.0
        %376 = vmatprep.subr.mxu0 0.0
        %377 = vmatpush1.msra.mxu0 0.0
        %378 = vmatprep.subr.mxu0 0.0
        %379 = vmatpush1.msra.mxu0 0.0
        %380 = vmatprep.subr.mxu0 0.0
        %381 = vmatpush1.msra.mxu0 0.0
        %382 = vmatprep.subr.mxu0 0.0
        %383 = vmatpush1.msra.mxu0 0.0
        %384 = vmatprep.subr.mxu0 0.0
        %385 = vmatpush1.msra.mxu0 0.0
        %386 = vmatprep.subr.mxu0 0.0
        %387 = vmatpush1.msra.mxu0 0.0
        %388 = vmatprep.subr.mxu0 0.0
        %389 = vmatpush1.msra.mxu0 0.0
        %390 = vmatprep.subr.mxu0 0.0
        %391 = vmatpush1.msra.mxu0 0.0
        %392 = vmatprep.subr.mxu0 0.0
        %393 = vmatpush1.msra.mxu0 0.0
        %394 = vmatprep.subr.mxu0 0.0
        %395 = vmatpush1.msra.mxu0 0.0
        %396 = vmatprep.subr.mxu0 0.0
        %397 = vmatpush1.msra.mxu0 0.0
        %398 = vmatprep.subr.mxu0 0.0
        %399 = vmatpush1.msra.mxu0 0.0
        %400 = vmatprep.subr.mxu0 0.0
        %401 = vmatpush1.msra.mxu0 0.0
        %402 = vmatprep.subr.mxu0 0.0
        %403 = vmatpush1.msra.mxu0 0.0
        %404 = vmatprep.subr.mxu0 0.0
        %405 = vmatpush1.msra.mxu0 0.0
        %406 = vmatprep.subr.mxu0 0.0
        %407 = vmatpush1.msra.mxu0 0.0
        %408 = vmatprep.subr.mxu0 0.0
        %409 = vmatpush1.msra.mxu0 0.0
        %410 = vmatprep.subr.mxu0 0.0
        %411 = vmatpush1.msra.mxu0 0.0
        %412 = vmatprep.subr.mxu0 0.0
        %413 = vmatpush1.msra.mxu0 0.0
        %414 = vmatprep.subr.mxu0 0.0
        %415 = vmatpush1.msra.mxu0 0.0
        %416 = vmatprep.subr.mxu0 0.0
        %417 = vmatpush1.msra.mxu0 0.0
        %418 = vmatprep.subr.mxu0 0.0
        %419 = vmatpush1.msra.mxu0 0.0
        %420 = vmatprep.subr.mxu0 0.0
        %421 = vmatpush1.msra.mxu0 0.0
        %422 = vmatprep.mubr.f32.mxu0 0.0
        %423 = vmatmul.mubr.f32.gmra.mrb[0].mxu0 %v347
        %v424 = vpop.f32.mrb[0].mxu0
        %v425 = vadd.f32 %v328, %v424
        %v426 = vpop.f32.mrb[0].mxu0
        %427 = vmatprep.mubr.f32.mxu0 0.0
        %428 = vmatmul.mubr.f32.gmra.mrb[0].mxu0 %v350
        %v429 = vpop.f32.mrb[0].mxu0
        %v430 = vadd.f32 %v333, %v429
        %v431 = vpop.f32.mrb[0].mxu0
        %432 = vmatprep.mubr.f32.mxu0 0.0
        %433 = vmatmul.mubr.f32.gmra.mrb[0].mxu0 %v353
        %v434 = vpop.f32.mrb[0].mxu0
        %v435 = vadd.f32 %v338, %v434
        %v436 = vpop.f32.mrb[0].mxu0
        %437 = vmatprep.mubr.f32.mxu0 0.0
        %438 = vmatmul.mubr.f32.gmra.mrb[0].mxu0 %v356
        %v439 = vpop.f32.mrb[0].mxu0
        %v440 = vadd.f32 %v343, %v439
        %v441 = vpop.f32.mrb[0].mxu0
        %442 = vdwg.mxu0
        %v443 = vadd.f32 %v425, %v430
        %v444 = vadd.f32 %v443, %v435
        %v445 = vadd.f32 %v444, %v440
        %v446 = vrot.slane %v445, 4
        %v447 = vadd.f32 %v445, %v446
        %v448 = vrot.slane %v447, 2
        %v449 = vadd.f32 %v447, %v448
        %v450 = vrot.slane %v449, 1
        %v451 = vadd.f32 %v449, %v450
        %v452 = vrcp.pop 32.0
        %v453 = vmul.f32 %v451, %v452
        %v454 = vsub.f32 %v425, %v453
        %v455 = vsub.f32 %v430, %v453
        %v456 = vsub.f32 %v435, %v453
        %v457 = vsub.f32 %v440, %v453
        %v458 = vmul.f32 %v454, %v454
        %v459 = vmul.f32 %v455, %v455
        %v460 = vmul.f32 %v456, %v456
        %v461 = vmul.f32 %v457, %v457
        %v462 = vadd.f32 %v458, %v459
        %v463 = vadd.f32 %v462, %v460
        %v464 = vadd.f32 %v463, %v461
        %v465 = vrot.slane %v464, 4
        %v466 = vadd.f32 %v464, %v465
        %v467 = vrot.slane %v466, 2
        %v468 = vadd.f32 %v466, %v467
        %v469 = vrot.slane %v468, 1
        %v470 = vadd.f32 %v468, %v469
        %v471 = vmul.f32 %v470, 0.032258064
        %v472 = vrsqrt.pop %v471
        %v473 = vmul.f32 %v471, %v472
        %vm474 = vcmp.eq.f32.partialorder %v471, inf
        %v475 = vsel %vm474, %v471, %v473
        %vm476 = vcmp.eq.f32.partialorder %v471, 0.0
        %v477 = vand.u32 %v471, 2147483648
        %v478 = vsel %vm476, %v477, %v475
        %v479 = vrsqrt.pop %v478
        %v480 = vmul.f32 %v478, %v479
        %vm481 = vcmp.eq.f32.partialorder %v478, inf
        %v482 = vsel %vm481, %v478, %v480
        %vm483 = vcmp.eq.f32.partialorder %v478, 0.0
        %v484 = vand.u32 %v478, 2147483648
        %v485 = vsel %vm483, %v484, %v482
        %v486 = vrcp.pop %v485
        %v487 = vmul.f32 %v454, %v486
        %v488 = vmul.f32 %v455, %v486
        %v489 = vmul.f32 %v456, %v486
        %v490 = vmul.f32 %v457, %v486
        %v491 = vld [vmem:[%s3] sm:$0xff]
        %v492 = vld [vmem:[%s3 + $0x8] sm:$0xff]
        %v493 = vld [vmem:[%s3 + $0x10] sm:$0xff]
        %v494 = vld [vmem:[%s3 + $0x18] sm:$0xff]
        %v495 = vld [vmem:[%s4] sm:$0xff]
        %v496 = vld [vmem:[%s4 + $0x8] sm:$0xff]
        %v497 = vld [vmem:[%s4 + $0x10] sm:$0xff]
        %v498 = vld [vmem:[%s4 + $0x18] sm:$0xff]
        %v499 = vmax.f32 %v487, 0.0
        %v500 = vmax.f32 %v488, 0.0
        %v501 = vmax.f32 %v489, 0.0
        %v502 = vmax.f32 %v490, 0.0
        %504 = vset.pattern.permute.xlu0 0
        %505 = vperm.xlu0 %504, %v495
        %v506 = vpop.permute.xlu0 %505
        %509 = vset.pattern.permute.xlu0 0
        %510 = vperm.xlu0 %509, %v496
        %v511 = vpop.permute.xlu0 %510
        %514 = vset.pattern.permute.xlu0 0
        %515 = vperm.xlu0 %514, %v497
        %v516 = vpop.permute.xlu0 %515
        %519 = vset.pattern.permute.xlu0 0
        %520 = vperm.xlu0 %519, %v498
        %v521 = vpop.permute.xlu0 %520
        %vm523 = vcmask 261120
        %v525 = vsel %vm523, %v491, 0
        %v528 = vsel %vm523, %v492, 0
        %v531 = vsel %vm523, %v493, 0
        %v534 = vsel %vm523, %v494, 0
        %536 = vmatprep.subr.mxu0 0.0
        %537 = vmatpush1.msra.mxu0 %v499
        %538 = vmatprep.subr.mxu0 0.0
        %539 = vmatpush1.msra.mxu0 %v500
        %540 = vmatprep.subr.mxu0 0.0
        %541 = vmatpush1.msra.mxu0 %v501
        %542 = vmatprep.subr.mxu0 0.0
        %543 = vmatpush1.msra.mxu0 %v502
        %544 = vmatprep.subr.mxu0 0.0
        %545 = vmatpush1.msra.mxu0 0.0
        %546 = vmatprep.subr.mxu0 0.0
        %547 = vmatpush1.msra.mxu0 0.0
        %548 = vmatprep.subr.mxu0 0.0
        %549 = vmatpush1.msra.mxu0 0.0
        %550 = vmatprep.subr.mxu0 0.0
        %551 = vmatpush1.msra.mxu0 0.0
        %552 = vmatprep.subr.mxu0 0.0
        %553 = vmatpush1.msra.mxu0 0.0
        %554 = vmatprep.subr.mxu0 0.0
        %555 = vmatpush1.msra.mxu0 0.0
        %556 = vmatprep.subr.mxu0 0.0
        %557 = vmatpush1.msra.mxu0 0.0
        %558 = vmatprep.subr.mxu0 0.0
        %559 = vmatpush1.msra.mxu0 0.0
        %560 = vmatprep.subr.mxu0 0.0
        %561 = vmatpush1.msra.mxu0 0.0
        %562 = vmatprep.subr.mxu0 0.0
        %563 = vmatpush1.msra.mxu0 0.0
        %564 = vmatprep.subr.mxu0 0.0
        %565 = vmatpush1.msra.mxu0 0.0
        %566 = vmatprep.subr.mxu0 0.0
        %567 = vmatpush1.msra.mxu0 0.0
        %568 = vmatprep.subr.mxu0 0.0
        %569 = vmatpush1.msra.mxu0 0.0
        %570 = vmatprep.subr.mxu0 0.0
        %571 = vmatpush1.msra.mxu0 0.0
        %572 = vmatprep.subr.mxu0 0.0
        %573 = vmatpush1.msra.mxu0 0.0
        %574 = vmatprep.subr.mxu0 0.0
        %575 = vmatpush1.msra.mxu0 0.0
        %576 = vmatprep.subr.mxu0 0.0
        %577 = vmatpush1.msra.mxu0 0.0
        %578 = vmatprep.subr.mxu0 0.0
        %579 = vmatpush1.msra.mxu0 0.0
        %580 = vmatprep.subr.mxu0 0.0
        %581 = vmatpush1.msra.mxu0 0.0
        %582 = vmatprep.subr.mxu0 0.0
        %583 = vmatpush1.msra.mxu0 0.0
        %584 = vmatprep.subr.mxu0 0.0
        %585 = vmatpush1.msra.mxu0 0.0
        %586 = vmatprep.subr.mxu0 0.0
        %587 = vmatpush1.msra.mxu0 0.0
        %588 = vmatprep.subr.mxu0 0.0
        %589 = vmatpush1.msra.mxu0 0.0
        %590 = vmatprep.subr.mxu0 0.0
        %591 = vmatpush1.msra.mxu0 0.0
        %592 = vmatprep.subr.mxu0 0.0
        %593 = vmatpush1.msra.mxu0 0.0
        %594 = vmatprep.subr.mxu0 0.0
        %595 = vmatpush1.msra.mxu0 0.0
        %596 = vmatprep.subr.mxu0 0.0
        %597 = vmatpush1.msra.mxu0 0.0
        %598 = vmatprep.subr.mxu0 0.0
        %599 = vmatpush1.msra.mxu0 0.0
        %600 = vmatprep.mubr.f32.mxu0 0.0
        %601 = vmatmul.mubr.f32.gmra.mrb[0].mxu0 %v525
        %v602 = vpop.f32.mrb[0].mxu0
        %v603 = vadd.f32 %v506, %v602
        %v604 = vpop.f32.mrb[0].mxu0
        %605 = vmatprep.mubr.f32.mxu0 0.0
        %606 = vmatmul.mubr.f32.gmra.mrb[0].mxu0 %v528
        %v607 = vpop.f32.mrb[0].mxu0
        %v608 = vadd.f32 %v511, %v607
        %v609 = vpop.f32.mrb[0].mxu0
        %610 = vmatprep.mubr.f32.mxu0 0.0
        %611 = vmatmul.mubr.f32.gmra.mrb[0].mxu0 %v531
        %v612 = vpop.f32.mrb[0].mxu0
        %v613 = vadd.f32 %v516, %v612
        %v614 = vpop.f32.mrb[0].mxu0
        %615 = vmatprep.mubr.f32.mxu0 0.0
        %616 = vmatmul.mubr.f32.gmra.mrb[0].mxu0 %v534
        %v617 = vpop.f32.mrb[0].mxu0
        %v618 = vadd.f32 %v521, %v617
        %v619 = vpop.f32.mrb[0].mxu0
        %620 = vdwg.mxu0
        %v621 = vadd.f32 %v603, %v608
        %v622 = vadd.f32 %v621, %v613
        %v623 = vadd.f32 %v622, %v618
        %v624 = vrot.slane %v623, 4
        %v625 = vadd.f32 %v623, %v624
        %v626 = vrot.slane %v625, 2
        %v627 = vadd.f32 %v625, %v626
        %v628 = vrot.slane %v627, 1
        %v629 = vadd.f32 %v627, %v628
        %v630 = vmul.f32 %v629, %v452
        %v631 = vsub.f32 %v603, %v630
        %v632 = vsub.f32 %v608, %v630
        %v633 = vsub.f32 %v613, %v630
        %v634 = vsub.f32 %v618, %v630
        %v635 = vmul.f32 %v631, %v631
        %v636 = vmul.f32 %v632, %v632
        %v637 = vmul.f32 %v633, %v633
        %v638 = vmul.f32 %v634, %v634
        %v639 = vadd.f32 %v635, %v636
        %v640 = vadd.f32 %v639, %v637
        %v641 = vadd.f32 %v640, %v638
        %v642 = vrot.slane %v641, 4
        %v643 = vadd.f32 %v641, %v642
        %v644 = vrot.slane %v643, 2
        %v645 = vadd.f32 %v643, %v644
        %v646 = vrot.slane %v645, 1
        %v647 = vadd.f32 %v645, %v646
        %v648 = vmul.f32 %v647, 0.032258064
        %v649 = vrsqrt.pop %v648
        %v650 = vmul.f32 %v648, %v649
        %vm651 = vcmp.eq.f32.partialorder %v648, inf
        %v652 = vsel %vm651, %v648, %v650
        %vm653 = vcmp.eq.f32.partialorder %v648, 0.0
        %v654 = vand.u32 %v648, 2147483648
        %v655 = vsel %vm653, %v654, %v652
        %v656 = vrsqrt.pop %v655
        %v657 = vmul.f32 %v655, %v656
        %vm658 = vcmp.eq.f32.partialorder %v655, inf
        %v659 = vsel %vm658, %v655, %v657
        %vm660 = vcmp.eq.f32.partialorder %v655, 0.0
        %v661 = vand.u32 %v655, 2147483648
        %v662 = vsel %vm660, %v661, %v659
        %v663 = vrcp.pop %v662
        %v664 = vmul.f32 %v631, %v663
        %v665 = vmul.f32 %v632, %v663
        %v666 = vmul.f32 %v633, %v663
        %v667 = vmul.f32 %v634, %v663
        %v668 = vld [vmem:[%s5] sm:$0xff]
        %v669 = vld [vmem:[%s5 + $0x8] sm:$0x3]
        %v670 = vld [vmem:[%s6] sm:$0xff]
        %v671 = vld [vmem:[%s6 + $0x8] sm:$0x3]
        %v672 = vmax.f32 %v664, 0.0
        %v673 = vmax.f32 %v665, 0.0
        %v674 = vmax.f32 %v666, 0.0
        %v675 = vmax.f32 %v667, 0.0
        %677 = vset.pattern.permute.xlu0 0
        %678 = vperm.xlu0 %677, %v670
        %v679 = vpop.permute.xlu0 %678
        %682 = vset.pattern.permute.xlu0 0
        %683 = vperm.xlu0 %682, %v671
        %v684 = vpop.permute.xlu0 %683
        %v687 = vsel %vm523, %v668, 0
        %v690 = vsel %vm523, %v669, 0
        %692 = vmatprep.subr.mxu0 0.0
        %693 = vmatpush1.msra.mxu0 %v672
        %694 = vmatprep.subr.mxu0 0.0
        %695 = vmatpush1.msra.mxu0 %v673
        %696 = vmatprep.subr.mxu0 0.0
        %697 = vmatpush1.msra.mxu0 %v674
        %698 = vmatprep.subr.mxu0 0.0
        %699 = vmatpush1.msra.mxu0 %v675
        %700 = vmatprep.subr.mxu0 0.0
        %701 = vmatpush1.msra.mxu0 0.0
        %702 = vmatprep.subr.mxu0 0.0
        %703 = vmatpush1.msra.mxu0 0.0
        %704 = vmatprep.subr.mxu0 0.0
        %705 = vmatpush1.msra.mxu0 0.0
        %706 = vmatprep.subr.mxu0 0.0
        %707 = vmatpush1.msra.mxu0 0.0
        %708 = vmatprep.subr.mxu0 0.0
        %709 = vmatpush1.msra.mxu0 0.0
        %710 = vmatprep.subr.mxu0 0.0
        %711 = vmatpush1.msra.mxu0 0.0
        %712 = vmatprep.subr.mxu0 0.0
        %713 = vmatpush1.msra.mxu0 0.0
        %714 = vmatprep.subr.mxu0 0.0
        %715 = vmatpush1.msra.mxu0 0.0
        %716 = vmatprep.subr.mxu0 0.0
        %717 = vmatpush1.msra.mxu0 0.0
        %718 = vmatprep.subr.mxu0 0.0
        %719 = vmatpush1.msra.mxu0 0.0
        %720 = vmatprep.subr.mxu0 0.0
        %721 = vmatpush1.msra.mxu0 0.0
        %722 = vmatprep.subr.mxu0 0.0
        %723 = vmatpush1.msra.mxu0 0.0
        %724 = vmatprep.subr.mxu0 0.0
        %725 = vmatpush1.msra.mxu0 0.0
        %726 = vmatprep.subr.mxu0 0.0
        %727 = vmatpush1.msra.mxu0 0.0
        %728 = vmatprep.subr.mxu0 0.0
        %729 = vmatpush1.msra.mxu0 0.0
        %730 = vmatprep.subr.mxu0 0.0
        %731 = vmatpush1.msra.mxu0 0.0
        %732 = vmatprep.subr.mxu0 0.0
        %733 = vmatpush1.msra.mxu0 0.0
        %734 = vmatprep.subr.mxu0 0.0
        %735 = vmatpush1.msra.mxu0 0.0
        %736 = vmatprep.subr.mxu0 0.0
        %737 = vmatpush1.msra.mxu0 0.0
        %738 = vmatprep.subr.mxu0 0.0
        %739 = vmatpush1.msra.mxu0 0.0
        %740 = vmatprep.subr.mxu0 0.0
        %741 = vmatpush1.msra.mxu0 0.0
        %742 = vmatprep.subr.mxu0 0.0
        %743 = vmatpush1.msra.mxu0 0.0
        %744 = vmatprep.subr.mxu0 0.0
        %745 = vmatpush1.msra.mxu0 0.0
        %746 = vmatprep.subr.mxu0 0.0
        %747 = vmatpush1.msra.mxu0 0.0
        %748 = vmatprep.subr.mxu0 0.0
        %749 = vmatpush1.msra.mxu0 0.0
        %750 = vmatprep.subr.mxu0 0.0
        %751 = vmatpush1.msra.mxu0 0.0
        %752 = vmatprep.subr.mxu0 0.0
        %753 = vmatpush1.msra.mxu0 0.0
        %754 = vmatprep.subr.mxu0 0.0
        %755 = vmatpush1.msra.mxu0 0.0
        %756 = vmatprep.mubr.f32.mxu0 0.0
        %757 = vmatmul.mubr.f32.gmra.mrb[0].mxu0 %v687
        %v758 = vpop.f32.mrb[0].mxu0
        %v759 = vadd.f32 %v679, %v758
        %v760 = vpop.f32.mrb[0].mxu0
        %761 = vmatprep.mubr.f32.mxu0 0.0
        %762 = vmatmul.mubr.f32.gmra.mrb[0].mxu0 %v690
        %v763 = vpop.f32.mrb[0].mxu0
        %v764 = vadd.f32 %v684, %v763
        %v765 = vpop.f32.mrb[0].mxu0
        %766 = vdwg.mxu0
        %vm767 = vcmask 1041408
        %v768 = vsel %vm767, %v764, 0.0
        %v769 = vadd.f32 %v759, %v768
        %v770 = vrot.slane %v769, 4
        %v771 = vadd.f32 %v769, %v770
        %v772 = vrot.slane %v771, 2
        %v773 = vadd.f32 %v771, %v772
        %v774 = vrot.slane %v773, 1
        %v775 = vadd.f32 %v773, %v774
        %v776 = vrcp.pop 10.0
        %v777 = vmul.f32 %v775, %v776
        %v778 = vsub.f32 %v759, %v777
        %v779 = vsub.f32 %v764, %v777
        %v780 = vmul.f32 %v778, %v778
        %v781 = vmul.f32 %v779, %v779
        %v782 = vsel %vm767, %v781, 0.0
        %v783 = vadd.f32 %v780, %v782
        %v784 = vrot.slane %v783, 4
        %v785 = vadd.f32 %v783, %v784
        %v786 = vrot.slane %v785, 2
        %v787 = vadd.f32 %v785, %v786
        %v788 = vrot.slane %v787, 1
        %v789 = vadd.f32 %v787, %v788
        %v790 = vmul.f32 %v789, 0.11111111
        %v791 = vrsqrt.pop %v790
        %v792 = vmul.f32 %v790, %v791
        %vm793 = vcmp.eq.f32.partialorder %v790, inf
        %v794 = vsel %vm793, %v790, %v792
        %vm795 = vcmp.eq.f32.partialorder %v790, 0.0
        %v796 = vand.u32 %v790, 2147483648
        %v797 = vsel %vm795, %v796, %v794
        %v798 = vrsqrt.pop %v797
        %v799 = vmul.f32 %v797, %v798
        %vm800 = vcmp.eq.f32.partialorder %v797, inf
        %v801 = vsel %vm800, %v797, %v799
        %vm802 = vcmp.eq.f32.partialorder %v797, 0.0
        %v803 = vand.u32 %v797, 2147483648
        %v804 = vsel %vm802, %v803, %v801
        %v805 = vrcp.pop %v804
        %v806 = vmul.f32 %v778, %v805
        %v807 = vmul.f32 %v779, %v805
        %v808 = vsel %vm767, %v807, -inf
        %v809 = vmax.f32 %v806, %v808
        %v810 = vrot.slane %v809, 4
        %v811 = vmax.f32 %v809, %v810
        %v812 = vrot.slane %v811, 2
        %v813 = vmax.f32 %v811, %v812
        %v814 = vrot.slane %v813, 1
        %v815 = vmax.f32 %v813, %v814
        %v816 = vsub.f32 %v806, %v815
        %v817 = vsub.f32 %v807, %v815
        %v818 = vmul.f32 %v816, 1.442695
        %v819 = vpow.pop %v818
        %v820 = vmul.f32 %v817, 1.442695
        %v821 = vpow.pop %v820
        %v822 = vsel %vm767, %v821, 0.0
        %v823 = vadd.f32 %v819, %v822
        %v824 = vrot.slane %v823, 4
        %v825 = vadd.f32 %v823, %v824
        %v826 = vrot.slane %v825, 2
        %v827 = vadd.f32 %v825, %v826
        %v828 = vrot.slane %v827, 1
        %v829 = vadd.f32 %v827, %v828
        %v830 = vrcp.pop %v829
        %v831 = vmul.f32 %v819, %v830
        %v832 = vmul.f32 %v821, %v830
        %833 = vst [vmem:[%s314] sm:$0xff] %v831
        %834 = vst [vmem:[%s314 + $0x8] sm:$0x3] %v832
        %s835 = sand.u32 %s181, 1
        %s836 = scalar_lea.sflag [#allocation4], %s835
        %s837 = sand.u32 %s181, 1
        %s838 = smul.addr %s837, 16
        %s839 = scalar_lea.vmem [#allocation3], %s838
        // Predicated region
        $region87: #{tpu_custom_call.1} parent=81 // pred_check
          %p840 = pneg %p191
        $region88: #{tpu_custom_call.1} parent=81 // pred_check_branch
          %842 = sbr.rel (%p840) target = $region90
        $region89: #{tpu_custom_call.1} parent=81 // pred_region
          %s844 = ssub.s32 256, 256
          %845 = vsyncadd %s836, %s844
          %s846 = smul.addr %s21, 128
          %s847 = scalar_lea.hbm %s7, %s846
          %s848 = sshll.u32 %s839, 4
          %s849 = int_to_ptr.vmem [resolvable:$true] %s848
          %854 = dma.vmem_to_hbm [thread:$0]  %s849, 256, %s847, %s836, 128, 256, 8
        $region90: #{tpu_custom_call.1} parent=81 // pred_fallthru
          _
      $region82: #{tpu_custom_call.1} parent=5 // pred_fallthru
        _
      %p855 = scmp.le.s32.totalorder 2, %s16
      // Predicated region
      $region91: #{tpu_custom_call.1} parent=5 // pred_check
        %p856 = pneg %p855
      $region92: #{tpu_custom_call.1} parent=5 // pred_check_branch
        %858 = sbr.rel (%p856) target = $region94
      $region93: #{tpu_custom_call.1} parent=5 // pred_region
        %s859 = ssub.s32 %s16, 2
        // Predicated region
        $region95: #{tpu_custom_call.1} parent=93 // pred_check
          %p860 = pneg %p197
        $region96: #{tpu_custom_call.1} parent=93 // pred_check_branch
          %862 = sbr.rel (%p860) target = $region98
        $region97: #{tpu_custom_call.1} parent=93 // pred_region
          %s863 = sand.u32 %s182, 1
          %s864 = scalar_lea.sflag [#allocation4], %s863
          %s865 = sand.u32 %s182, 1
          %s866 = smul.addr %s865, 16
          %s867 = scalar_lea.vmem [#allocation3], %s866
          %868 = dma.done %s864, 256
        $region98: #{tpu_custom_call.1} parent=93 // pred_fallthru
          _
      $region94: #{tpu_custom_call.1} parent=5 // pred_fallthru
        _
    $region6: #{tpu_custom_call.1} parent=1 // loop_footer
      %s20 = sadd.s32 1, %s16
    $region7: #{tpu_custom_call.1} parent=1 // loop_footer_branch
      %15 = sbr.rel target = $region3
    $region8: #{tpu_custom_call.1} parent=1 // loop_exit
      _
    %869 = vsyncpa [#allocation4], 1
    %s870 = scalar_lea.sflag [#allocation4], 1
    %871 = vsyncpa %s870, 1

</llo_original>
